<compile_context>
chip_gen: v6e
topology: v6e:2x2x1
jax: 0.10.0
libtpu: 0.0.40
codegen_flags: <defaults>
</compile_context>

<pallas_src>
import functools

import jax
import jax.numpy as jnp
from jax.experimental import pallas as pl
from jax.experimental.pallas import tpu as pltpu

# Logical dims of the PyTorch module.
IN_F, H1, H2, OUT_F = 25, 256, 128, 25
# Lane-padded output width (last-axis multiple of 128 -> unmasked full-lane stores).
OUT_PAD = 128


def _round_up(n, m):
    return ((n + m - 1) // m) * m


def mlp_kernel(x_ref, w1_ref, b1_ref, w2_ref, b2_ref, w3_ref, b3_ref, o_ref):
    # x tile: [TM, 25] f32 -> bf16; weights bf16; biases f32; MXU accumulates f32.
    x = x_ref[...].astype(jnp.bfloat16)

    h1 = jnp.dot(x, w1_ref[...], preferred_element_type=jnp.float32) + b1_ref[...]
    h1 = jnp.maximum(h1, 0.0)                                   # f32 elementwise (v5e-safe)

    h2 = jnp.dot(h1.astype(jnp.bfloat16), w2_ref[...],
                 preferred_element_type=jnp.float32) + b2_ref[...]
    h2 = jnp.maximum(h2, 0.0)

    y = jnp.dot(h2.astype(jnp.bfloat16), w3_ref[...],
                preferred_element_type=jnp.float32) + b3_ref[...]
    o_ref[...] = y.astype(o_ref.dtype)                          # bf16, full 128-lane store


def _choose_tiling(batch, tm):
    """Pick (tile_rows, padded_batch, n_steps).

    Guarantees >= 2 grid steps whenever the 8-rounded batch exceeds 8 rows
    (so both v7x TensorCores get work) and splits the batch evenly so padded
    waste stays below 8 rows per step.
    """
    b8 = _round_up(batch, 8)
    n_steps = 1 if b8 <= 8 else max(2, pl.cdiv(b8, tm))
    tm_eff = _round_up(pl.cdiv(b8, n_steps), 8)
    b_pad = n_steps * tm_eff
    return tm_eff, b_pad, n_steps


@functools.partial(jax.jit, static_argnames=("tm",))
def tictactoe_net_forward(x, params, tm=1024):
    """x: [B, 25] float32.  params: bf16 weights [in,out] + f32 biases [1,out]
    (layer-3 weight/bias lane-padded to 128 output columns with zeros)."""
    B = x.shape[0]
    tm_eff, b_pad, n_steps = _choose_tiling(B, tm)

    # Only row-pad the batch when needed (cheap: 100 B/row, no feature padding).
    if b_pad != B:
        x = jnp.pad(x, ((0, b_pad - B), (0, 0)))

    w1, b1 = params["w1"], params["b1"]
    w2, b2 = params["w2"], params["b2"]
    w3, b3 = params["w3"], params["b3"]

    flops = 2 * b_pad * (IN_F * H1 + H1 * H2 + H2 * OUT_PAD)
    bytes_accessed = (
        b_pad * IN_F * 4 + b_pad * OUT_PAD * 2
        + (w1.size + w2.size + w3.size) * 2
        + (b1.size + b2.size + b3.size) * 4
    )

    out_padded = pl.pallas_call(
        mlp_kernel,
        out_shape=jax.ShapeDtypeStruct((b_pad, OUT_PAD), jnp.bfloat16),
        grid=(n_steps,),
        in_specs=[
            pl.BlockSpec((tm_eff, IN_F), lambda i: (i, 0)),     # x tile (pipelined)
            pl.BlockSpec((IN_F, H1), lambda i: (0, 0)),         # w1 (VMEM-resident)
            pl.BlockSpec((1, H1), lambda i: (0, 0)),            # b1
            pl.BlockSpec((H1, H2), lambda i: (0, 0)),           # w2
            pl.BlockSpec((1, H2), lambda i: (0, 0)),            # b2
            pl.BlockSpec((H2, OUT_PAD), lambda i: (0, 0)),      # w3 (out cols padded)
            pl.BlockSpec((1, OUT_PAD), lambda i: (0, 0)),       # b3
        ],
        out_specs=pl.BlockSpec((tm_eff, OUT_PAD), lambda i: (i, 0)),
        compiler_params=pltpu.CompilerParams(
            dimension_semantics=("parallel",)),
        cost_estimate=pl.CostEstimate(
            flops=flops, transcendentals=0, bytes_accessed=bytes_accessed),
    )(x, w1, b1, w2, b2, w3, b3)

    # Fused slice + upcast (one cheap op); drop batch/lane padding.
    return out_padded[:B, :OUT_F].astype(jnp.float32)


def init_params(key):
    """PyTorch nn.Linear default init (U(-1/sqrt(fan_in), +1/sqrt(fan_in))),
    weights stored as [in, out]; layer-3 outputs lane-padded 25 -> 128 with zeros.
    Weights cast to bf16 (documented precision trade); biases kept f32."""
    dims = [(IN_F, H1), (H1, H2), (H2, OUT_F)]
    params = {}
    for idx, (fan_in, fan_out) in enumerate(dims, start=1):
        key, kw, kb = jax.random.split(key, 3)
        bound = 1.0 / jnp.sqrt(float(fan_in))
        w = jax.random.uniform(kw, (fan_in, fan_out), jnp.float32,
                               minval=-bound, maxval=bound)
        b = jax.random.uniform(kb, (1, fan_out), jnp.float32,
                               minval=-bound, maxval=bound)
        params[f"w{idx}"] = w
        params[f"b{idx}"] = b

    # Pad layer-3 output cols 25 -> 128 (zeros: padded output lanes stay inert).
    params["w3"] = jnp.pad(params["w3"], ((0, 0), (0, OUT_PAD - OUT_F)))
    params["b3"] = jnp.pad(params["b3"], ((0, 0), (0, OUT_PAD - OUT_F)))

    for i in (1, 2, 3):
        params[f"w{i}"] = params[f"w{i}"].astype(jnp.bfloat16)
    return params


def reference_forward(x, p):
    """Pure-JAX reference mirroring the kernel's bf16 round-trips / f32 accumulation."""
    f32 = jnp.float32
    w1, w2, w3 = p["w1"].astype(f32), p["w2"].astype(f32), p["w3"].astype(f32)
    xb = x.astype(jnp.bfloat16).astype(f32)
    h1 = jnp.maximum(xb @ w1 + p["b1"], 0.0)
    h1 = h1.astype(jnp.bfloat16).astype(f32)
    h2 = jnp.maximum(h1 @ w2 + p["b2"], 0.0)
    h2 = h2.astype(jnp.bfloat16).astype(f32)
    y = (h2 @ w3 + p["b3"]).astype(jnp.bfloat16).astype(f32)
    return y[:, :OUT_F]


if __name__ == "__main__":
    key = jax.random.PRNGKey(0)
    key, kx = jax.random.split(key)

    batch = 8
    x = jax.random.normal(kx, (batch, IN_F), dtype=jnp.float32)
    params = init_params(key)

    out = tictactoe_net_forward(x, params)
    out = jax.block_until_ready(out)

    ref = reference_forward(x, params)
    assert out.shape == (batch, OUT_F), out.shape
    assert jnp.allclose(out, ref, atol=5e-3, rtol=5e-3), "mismatch vs reference"

    print("KERNEL_OK")
</pallas_src>

<mosaic_0001>
module attributes {stable_mosaic.version = 11 : i64} {
  func.func @mlp_kernel(%arg0: i32, %arg1: memref<8x25xf32, #tpu.memory_space<vmem>>, %arg2: memref<25x256xbf16, #tpu.memory_space<vmem>>, %arg3: memref<1x256xf32, #tpu.memory_space<vmem>>, %arg4: memref<256x128xbf16, #tpu.memory_space<vmem>>, %arg5: memref<1x128xf32, #tpu.memory_space<vmem>>, %arg6: memref<128x128xbf16, #tpu.memory_space<vmem>>, %arg7: memref<1x128xf32, #tpu.memory_space<vmem>>, %arg8: memref<8x128xbf16, #tpu.memory_space<vmem>>) attributes {dimension_semantics = [#tpu.dimension_semantics<parallel>], iteration_bounds = array<i64: 1>, scalar_prefetch = 0 : i64, scratch_operands = 0 : i64, tpu.core_type = #tpu.core_type<tc>, window_params = [{transform_indices = @transform_0, window_bounds = array<i64: 8, 25>}, {pipeline_mode = #tpu.pipeline_mode<synchronous>, transform_indices = @transform_1, window_bounds = array<i64: 25, 256>}, {pipeline_mode = #tpu.pipeline_mode<synchronous>, transform_indices = @transform_2, window_bounds = array<i64: 1, 256>}, {pipeline_mode = #tpu.pipeline_mode<synchronous>, transform_indices = @transform_3, window_bounds = array<i64: 256, 128>}, {pipeline_mode = #tpu.pipeline_mode<synchronous>, transform_indices = @transform_4, window_bounds = array<i64: 1, 128>}, {pipeline_mode = #tpu.pipeline_mode<synchronous>, transform_indices = @transform_5, window_bounds = array<i64: 128, 128>}, {pipeline_mode = #tpu.pipeline_mode<synchronous>, transform_indices = @transform_6, window_bounds = array<i64: 1, 128>}, {transform_indices = @transform_7, window_bounds = array<i64: 8, 128>}]} {
    %c0 = arith.constant 0 : index
    %c0_0 = arith.constant 0 : index
    %0 = vector.load %arg1[%c0, %c0_0] : memref<8x25xf32, #tpu.memory_space<vmem>>, vector<8x25xf32>
    %1 = arith.truncf %0 : vector<8x25xf32> to vector<8x25xbf16>
    %c0_1 = arith.constant 0 : index
    %c0_2 = arith.constant 0 : index
    %2 = vector.load %arg2[%c0_1, %c0_2] : memref<25x256xbf16, #tpu.memory_space<vmem>>, vector<25x256xbf16>
    %cst = arith.constant dense<0.000000e+00> : vector<8x256xf32>
    %3 = tpu.matmul %1, %2, %cst {dimension_numbers = #tpu.dot_dimension_numbers<[1], [0], [0], [1], [0, 0, 1, 1], [], []>} : vector<8x25xbf16>, vector<25x256xbf16>, vector<8x256xf32> -> vector<8x256xf32>
    %c0_3 = arith.constant 0 : index
    %c0_4 = arith.constant 0 : index
    %4 = vector.load %arg3[%c0_3, %c0_4] : memref<1x256xf32, #tpu.memory_space<vmem>>, vector<1x256xf32>
    %5 = vector.broadcast %4 : vector<1x256xf32> to vector<8x256xf32>
    %6 = arith.addf %3, %5 : vector<8x256xf32>
    %cst_5 = arith.constant 0.000000e+00 : f32
    %7 = vector.broadcast %cst_5 : f32 to vector<8x256xf32>
    %8 = arith.maximumf %6, %7 : vector<8x256xf32>
    %9 = arith.truncf %8 : vector<8x256xf32> to vector<8x256xbf16>
    %c0_6 = arith.constant 0 : index
    %c0_7 = arith.constant 0 : index
    %10 = vector.load %arg4[%c0_6, %c0_7] : memref<256x128xbf16, #tpu.memory_space<vmem>>, vector<256x128xbf16>
    %cst_8 = arith.constant dense<0.000000e+00> : vector<8x128xf32>
    %11 = tpu.matmul %9, %10, %cst_8 {dimension_numbers = #tpu.dot_dimension_numbers<[1], [0], [0], [1], [0, 0, 1, 1], [], []>} : vector<8x256xbf16>, vector<256x128xbf16>, vector<8x128xf32> -> vector<8x128xf32>
    %c0_9 = arith.constant 0 : index
    %c0_10 = arith.constant 0 : index
    %12 = vector.load %arg5[%c0_9, %c0_10] : memref<1x128xf32, #tpu.memory_space<vmem>>, vector<1x128xf32>
    %13 = vector.broadcast %12 : vector<1x128xf32> to vector<8x128xf32>
    %14 = arith.addf %11, %13 : vector<8x128xf32>
    %cst_11 = arith.constant 0.000000e+00 : f32
    %15 = vector.broadcast %cst_11 : f32 to vector<8x128xf32>
    %16 = arith.maximumf %14, %15 : vector<8x128xf32>
    %17 = arith.truncf %16 : vector<8x128xf32> to vector<8x128xbf16>
    %c0_12 = arith.constant 0 : index
    %c0_13 = arith.constant 0 : index
    %18 = vector.load %arg6[%c0_12, %c0_13] : memref<128x128xbf16, #tpu.memory_space<vmem>>, vector<128x128xbf16>
    %cst_14 = arith.constant dense<0.000000e+00> : vector<8x128xf32>
    %19 = tpu.matmul %17, %18, %cst_14 {dimension_numbers = #tpu.dot_dimension_numbers<[1], [0], [0], [1], [0, 0, 1, 1], [], []>} : vector<8x128xbf16>, vector<128x128xbf16>, vector<8x128xf32> -> vector<8x128xf32>
    %c0_15 = arith.constant 0 : index
    %c0_16 = arith.constant 0 : index
    %20 = vector.load %arg7[%c0_15, %c0_16] : memref<1x128xf32, #tpu.memory_space<vmem>>, vector<1x128xf32>
    %21 = vector.broadcast %20 : vector<1x128xf32> to vector<8x128xf32>
    %22 = arith.addf %19, %21 : vector<8x128xf32>
    %23 = arith.truncf %22 : vector<8x128xf32> to vector<8x128xbf16>
    %c0_17 = arith.constant 0 : index
    %c0_18 = arith.constant 0 : index
    %24 = vector.load %arg8[%c0_17, %c0_18] : memref<8x128xbf16, #tpu.memory_space<vmem>>, vector<8x128xbf16>
    tpu.vector_store %arg8[%c0_17, %c0_18], %23 {strides = array<i32>} : memref<8x128xbf16, #tpu.memory_space<vmem>>, vector<8x128xbf16>,
    return
  }
  func.func @transform_0(%arg0: i32) -> (i32, i32) {
    %c0_i32 = arith.constant 0 : i32
    %c0_i32_0 = arith.constant 0 : i32
    return %arg0, %c0_i32 : i32, i32
  }
  func.func @transform_1(%arg0: i32) -> (i32, i32) {
    %c0_i32 = arith.constant 0 : i32
    %c0_i32_0 = arith.constant 0 : i32
    %c0_i32_1 = arith.constant 0 : i32
    return %c0_i32, %c0_i32_0 : i32, i32
  }
  func.func @transform_2(%arg0: i32) -> (i32, i32) {
    %c0_i32 = arith.constant 0 : i32
    %c0_i32_0 = arith.constant 0 : i32
    %c0_i32_1 = arith.constant 0 : i32
    return %c0_i32, %c0_i32_0 : i32, i32
  }
  func.func @transform_3(%arg0: i32) -> (i32, i32) {
    %c0_i32 = arith.constant 0 : i32
    %c0_i32_0 = arith.constant 0 : i32
    %c0_i32_1 = arith.constant 0 : i32
    return %c0_i32, %c0_i32_0 : i32, i32
  }
  func.func @transform_4(%arg0: i32) -> (i32, i32) {
    %c0_i32 = arith.constant 0 : i32
    %c0_i32_0 = arith.constant 0 : i32
    %c0_i32_1 = arith.constant 0 : i32
    return %c0_i32, %c0_i32_0 : i32, i32
  }
  func.func @transform_5(%arg0: i32) -> (i32, i32) {
    %c0_i32 = arith.constant 0 : i32
    %c0_i32_0 = arith.constant 0 : i32
    %c0_i32_1 = arith.constant 0 : i32
    return %c0_i32, %c0_i32_0 : i32, i32
  }
  func.func @transform_6(%arg0: i32) -> (i32, i32) {
    %c0_i32 = arith.constant 0 : i32
    %c0_i32_0 = arith.constant 0 : i32
    %c0_i32_1 = arith.constant 0 : i32
    return %c0_i32, %c0_i32_0 : i32, i32
  }
  func.func @transform_7(%arg0: i32) -> (i32, i32) {
    %c0_i32 = arith.constant 0 : i32
    %c0_i32_0 = arith.constant 0 : i32
    return %arg0, %c0_i32 : i32, i32
  }
}

</mosaic_0001>

<llo_original>
// kernel: tictactoe_net_forward.1
$region0: #{tictactoe_net_forward.1}
  #allocation0 [shape = 'u32[]', space=smem, size = 0x4, offset = 0x4, fixed_abs, tag = 'smem constant byte address 0x4 - core index']
  #allocation1 [shape = 'u32[144,128]{1,0:T(1,128)}', space=vmem, size = 0x12000, scoped, tag = 'internal scratch']
  %s0 = inlined_call_operand.hbm [shape: f32[8,25], index: 0, kind: input, shape index: {}]
  %s1 = inlined_call_operand.hbm [shape: bf16[25,256], index: 1, kind: input, shape index: {}]
  %s2 = inlined_call_operand.hbm [shape: f32[1,256], index: 2, kind: input, shape index: {}]
  %s3 = inlined_call_operand.hbm [shape: bf16[256,128], index: 3, kind: input, shape index: {}]
  %s4 = inlined_call_operand.vmem [shape: f32[1,128], index: 4, kind: input, shape index: {}]
  %s5 = inlined_call_operand.hbm [shape: bf16[128,128], index: 5, kind: input, shape index: {}]
  %s6 = inlined_call_operand.vmem [shape: f32[1,128], index: 6, kind: input, shape index: {}]
  %s7 = inlined_call_operand.vmem [shape: bf16[8,128], index: 7, kind: output, shape index: {}]
  %s8 = sld [smem:[#allocation0]]
  $region58: #{tictactoe_net_forward.1} parent=0
    _
  %s10 = ssub.s32 1, %s8
  %s11 = scalar_select 0, %s10, %s8
  $region1: #{tictactoe_net_forward.1} parent=0
    #allocation2 [shape = 'u8[4096]{0}', space=vmem, size = 0x1000, scoped, tag = 'input window, operand 0, single buffered']
    #allocation3 [shape = 's32[1]{0}', space=sflag, size = 0x4, scoped, tag = 'scoped memory for tictactoe_net_forward.1']
    #allocation4 [shape = 'u8[16384]{0}', space=vmem, size = 0x4000, scoped, tag = 'input window, operand 1, single buffered']
    #allocation5 [shape = 's32[1]{0}', space=sflag, size = 0x4, scoped, tag = 'scoped memory for tictactoe_net_forward.1']
    #allocation6 [shape = 'u8[1024]{0}', space=vmem, size = 0x400, scoped, tag = 'input window, operand 2, single buffered']
    #allocation7 [shape = 'u8[65536]{0}', space=vmem, size = 0x10000, scoped, tag = 'input window, operand 3, single buffered']
    #allocation8 [shape = 's32[1]{0}', space=sflag, size = 0x4, scoped, tag = 'scoped memory for tictactoe_net_forward.1']
    #allocation9 [shape = 'u8[32768]{0}', space=vmem, size = 0x8000, scoped, tag = 'input window, operand 5, single buffered']
    %12 = vsyncpa [#allocation3], 0
    %13 = vsyncpa [#allocation5], 0
    %14 = vsyncpa [#allocation8], 0
    // Predicated region
    $region2: #{tictactoe_net_forward.1} parent=1 // pred_check
      _
    $region3: #{tictactoe_net_forward.1} parent=1 // pred_check_branch
      %16 = sbr.rel (0) target = $region5
    $region4: #{tictactoe_net_forward.1} parent=1 // pred_region
      %s18 = ssub.s32 128, 128
      %19 = vsyncadd [#allocation3], %s18
      %s21 = sshll.u32 [#allocation2], 4
      %s22 = int_to_ptr.vmem [resolvable:$true] %s21
      %24 = dma.hbm_to_vmem [thread:$0]  %s0, 128, %s22, [#allocation3]
    $region5: #{tictactoe_net_forward.1} parent=1 // pred_fallthru
      _
    // Predicated region
    $region6: #{tictactoe_net_forward.1} parent=1 // pred_check
      _
    $region7: #{tictactoe_net_forward.1} parent=1 // pred_check_branch
      %26 = sbr.rel (0) target = $region9
    $region8: #{tictactoe_net_forward.1} parent=1 // pred_region
      %s28 = ssub.s32 512, 512
      %29 = vsyncadd [#allocation5], %s28
      %s30 = sshll.u32 [#allocation4], 4
      %s31 = int_to_ptr.vmem [resolvable:$true] %s30
      %36 = dma.hbm_to_vmem [thread:$0]  %s1, 512, %s31, [#allocation5], 128, 128, 8
    $region9: #{tictactoe_net_forward.1} parent=1 // pred_fallthru
      _
    // Predicated region
    $region10: #{tictactoe_net_forward.1} parent=1 // pred_check
      _
    $region11: #{tictactoe_net_forward.1} parent=1 // pred_check_branch
      %38 = sbr.rel (0) target = $region13
    $region12: #{tictactoe_net_forward.1} parent=1 // pred_region
      %s40 = ssub.s32 32, 32
      %41 = vsyncadd [#allocation5], %s40
      %s43 = sshll.u32 [#allocation6], 4
      %s44 = int_to_ptr.vmem [resolvable:$true] %s43
      %46 = dma.hbm_to_vmem [thread:$0]  %s2, 32, %s44, [#allocation5]
    $region13: #{tictactoe_net_forward.1} parent=1 // pred_fallthru
      _
    // Predicated region
    $region14: #{tictactoe_net_forward.1} parent=1 // pred_check
      _
    $region15: #{tictactoe_net_forward.1} parent=1 // pred_check_branch
      %48 = sbr.rel (0) target = $region17
    $region16: #{tictactoe_net_forward.1} parent=1 // pred_region
      %s50 = ssub.s32 2048, 2048
      %51 = vsyncadd [#allocation8], %s50
      %s52 = sshll.u32 [#allocation7], 4
      %s53 = int_to_ptr.vmem [resolvable:$true] %s52
      %58 = dma.hbm_to_vmem [thread:$0]  %s3, 2048, %s53, [#allocation8], 64, 64, 4
    $region17: #{tictactoe_net_forward.1} parent=1 // pred_fallthru
      _
    // Predicated region
    $region18: #{tictactoe_net_forward.1} parent=1 // pred_check
      _
    $region19: #{tictactoe_net_forward.1} parent=1 // pred_check_branch
      %60 = sbr.rel (0) target = $region21
    $region20: #{tictactoe_net_forward.1} parent=1 // pred_region
      _
    $region21: #{tictactoe_net_forward.1} parent=1 // pred_fallthru
      _
    // Predicated region
    $region22: #{tictactoe_net_forward.1} parent=1 // pred_check
      _
    $region23: #{tictactoe_net_forward.1} parent=1 // pred_check_branch
      %62 = sbr.rel (0) target = $region25
    $region24: #{tictactoe_net_forward.1} parent=1 // pred_region
      %s64 = ssub.s32 1024, 1024
      %65 = vsyncadd [#allocation8], %s64
      %s66 = sshll.u32 [#allocation9], 4
      %s67 = int_to_ptr.vmem [resolvable:$true] %s66
      %72 = dma.hbm_to_vmem [thread:$0]  %s5, 1024, %s67, [#allocation8], 64, 64, 4
    $region25: #{tictactoe_net_forward.1} parent=1 // pred_fallthru
      _
    // Predicated region
    $region26: #{tictactoe_net_forward.1} parent=1 // pred_check
      _
    $region27: #{tictactoe_net_forward.1} parent=1 // pred_check_branch
      %74 = sbr.rel (0) target = $region29
    $region28: #{tictactoe_net_forward.1} parent=1 // pred_region
      _
    $region29: #{tictactoe_net_forward.1} parent=1 // pred_fallthru
      _
    // Predicated region
    $region30: #{tictactoe_net_forward.1} parent=1 // pred_check
      _
    $region31: #{tictactoe_net_forward.1} parent=1 // pred_check_branch
      %76 = sbr.rel (0) target = $region33
    $region32: #{tictactoe_net_forward.1} parent=1 // pred_region
      %77 = dma.done [#allocation3], 128
    $region33: #{tictactoe_net_forward.1} parent=1 // pred_fallthru
      _
    // Predicated region
    $region34: #{tictactoe_net_forward.1} parent=1 // pred_check
      _
    $region35: #{tictactoe_net_forward.1} parent=1 // pred_check_branch
      %79 = sbr.rel (0) target = $region37
    $region36: #{tictactoe_net_forward.1} parent=1 // pred_region
      %80 = dma.done [#allocation5], 512
    $region37: #{tictactoe_net_forward.1} parent=1 // pred_fallthru
      _
    // Predicated region
    $region38: #{tictactoe_net_forward.1} parent=1 // pred_check
      _
    $region39: #{tictactoe_net_forward.1} parent=1 // pred_check_branch
      %82 = sbr.rel (0) target = $region41
    $region40: #{tictactoe_net_forward.1} parent=1 // pred_region
      %83 = dma.done [#allocation5], 32
    $region41: #{tictactoe_net_forward.1} parent=1 // pred_fallthru
      _
    // Predicated region
    $region42: #{tictactoe_net_forward.1} parent=1 // pred_check
      _
    $region43: #{tictactoe_net_forward.1} parent=1 // pred_check_branch
      %85 = sbr.rel (0) target = $region45
    $region44: #{tictactoe_net_forward.1} parent=1 // pred_region
      %86 = dma.done [#allocation8], 2048
    $region45: #{tictactoe_net_forward.1} parent=1 // pred_fallthru
      _
    // Predicated region
    $region46: #{tictactoe_net_forward.1} parent=1 // pred_check
      _
    $region47: #{tictactoe_net_forward.1} parent=1 // pred_check_branch
      %88 = sbr.rel (0) target = $region49
    $region48: #{tictactoe_net_forward.1} parent=1 // pred_region
      %89 = dma.done [#allocation8], 1024
    $region49: #{tictactoe_net_forward.1} parent=1 // pred_fallthru
      _
    %v91 = vld [vmem:[#allocation2] sm:$0xff]
    %v92 = vpack.c.bf16 %v91, %v91
    %v93 = vld [vmem:[#allocation4] sm:$0xff]
    %v94 = vld [vmem:[#allocation4 + $0x8] sm:$0xff]
    %v95 = vld [vmem:[#allocation4 + $0x10] sm:$0xff]
    %v96 = vld [vmem:[#allocation4 + $0x18] sm:$0x11]
    %v97 = vld [vmem:[#allocation6] sm:$0x3]
    %v99 = vlaneseq
    %v100 = vshrl.u32 %v99, 7
    %v101 = vsub.s32 0, %v100
    %v102 = vrot.slane %v97, %v101
    %v103 = vlaneseq
    %v104 = vshrl.u32 %v103, 7
    %v105 = vsub.s32 1, %v104
    %v106 = vrot.slane %v97, %v105
    %v113 = vunpack.c.l.b16 %v93
    %v114 = vunpack.c.h.b16 %v93
    %v115 = vunpack.c.l.b16 %v94
    %v116 = vunpack.c.h.b16 %v94
    %v117 = vunpack.c.l.b16 %v95
    %v118 = vunpack.c.h.b16 %v95
    %v119 = vunpack.c.l.b16 %v96
    %v120 = vunpack.c.h.b16 %v96
    %v121 = vpack.c.b16 %v115, %v113
    %v122 = vpack.c.b16 %v116, %v114
    %v123 = vpack.c.b16 %v119, %v117
    %v124 = vpack.c.b16 %v120, %v118
    %vm127 = vcmask 203776
    %v129 = vsel %vm127, %v92, 0
    %vm131 = vcmask 1043456
    %vm132 = vcmask 1044480
    %v133 = vsel %vm131, 4294967295, 65535
    %v134 = vsel %vm132, %v133, 0
    %v136 = vand.u32 %v123, %v134
    %v139 = vand.u32 %v124, %v134
    %141 = vmatprep.subr.bf16.mxu0 0
    %142 = vmatpush1.bf16.msra.mxu0 0
    %143 = vmatprep.subr.bf16.mxu0 0
    %144 = vmatpush1.bf16.msra.mxu0 0
    %145 = vmatprep.subr.bf16.mxu0 0
    %146 = vmatpush1.bf16.msra.mxu0 0
    %147 = vmatprep.subr.bf16.mxu0 0
    %148 = vmatpush1.bf16.msra.mxu0 0
    %149 = vmatprep.subr.bf16.mxu0 0
    %150 = vmatpush1.bf16.msra.mxu0 0
    %151 = vmatprep.subr.bf16.mxu0 0
    %152 = vmatpush1.bf16.msra.mxu0 0
    %153 = vmatprep.subr.bf16.mxu0 %v139
    %154 = vmatpush1.bf16.msra.mxu0 %v136
    %155 = vmatprep.subr.bf16.mxu0 %v122
    %156 = vmatpush1.bf16.msra.mxu0 %v121
    %157 = vmatprep.subr.bf16.mxu0 0
    %158 = vmatpush2.bf16.msra.mxu0 0
    %159 = vmatprep.subr.bf16.mxu0 0
    %160 = vmatpush2.bf16.msra.mxu0 0
    %161 = vmatprep.subr.bf16.mxu0 0
    %162 = vmatpush2.bf16.msra.mxu0 0
    %163 = vmatprep.subr.bf16.mxu0 0
    %164 = vmatpush2.bf16.msra.mxu0 0
    %165 = vmatprep.subr.bf16.mxu0 0
    %166 = vmatpush2.bf16.msra.mxu0 0
    %167 = vmatprep.subr.bf16.mxu0 0
    %168 = vmatpush2.bf16.msra.mxu0 0
    %169 = vmatprep.subr.bf16.mxu0 0
    %170 = vmatpush2.bf16.msra.mxu0 0
    %171 = vmatprep.subr.bf16.mxu0 0
    %172 = vmatpush2.bf16.msra.mxu0 0
    %173 = vmatprep.mubr.bf16.mxu0 0
    %174 = vmatmul.mubr.bf16.gmra.mxu0 %v129
    %v175 = vpop.f32.mrf.mxu0
    %v176 = vadd.f32 %v102, %v175
    %v177 = vpop.f32.mrf.mxu0
    %v178 = vadd.f32 %v106, %v177
    %v179 = vpop.f32.mrf.mxu0
    %v180 = vpop.f32.mrf.mxu0
    %181 = vdwg.mxu0
    %v182 = vmax.f32 %v176, 0.0
    %v183 = vmax.f32 %v178, 0.0
    %v184 = vpack.c.bf16 %v182, %v182
    %v185 = vpack.c.bf16 %v183, %v183
    %v186 = vld [vmem:[#allocation7] sm:$0xf]
    %v187 = vld [vmem:[#allocation7 + $0x4] sm:$0xf]
    %v188 = vld [vmem:[#allocation7 + $0x8] sm:$0xf]
    %v189 = vld [vmem:[#allocation7 + $0xc] sm:$0xf]
    %v190 = vld [vmem:[#allocation7 + $0x10] sm:$0xf]
    %v191 = vld [vmem:[#allocation7 + $0x14] sm:$0xf]
    %v192 = vld [vmem:[#allocation7 + $0x18] sm:$0xf]
    %v193 = vld [vmem:[#allocation7 + $0x1c] sm:$0xf]
    %v194 = vld [vmem:[#allocation7 + $0x20] sm:$0xf]
    %v195 = vld [vmem:[#allocation7 + $0x24] sm:$0xf]
    %v196 = vld [vmem:[#allocation7 + $0x28] sm:$0xf]
    %v197 = vld [vmem:[#allocation7 + $0x2c] sm:$0xf]
    %v198 = vld [vmem:[#allocation7 + $0x30] sm:$0xf]
    %v199 = vld [vmem:[#allocation7 + $0x34] sm:$0xf]
    %v200 = vld [vmem:[#allocation7 + $0x38] sm:$0xf]
    %v201 = vld [vmem:[#allocation7 + $0x3c] sm:$0xf]
    %v202 = vld [vmem:[#allocation7 + $0x40] sm:$0xf]
    %v203 = vld [vmem:[#allocation7 + $0x44] sm:$0xf]
    %v204 = vld [vmem:[#allocation7 + $0x48] sm:$0xf]
    %v205 = vld [vmem:[#allocation7 + $0x4c] sm:$0xf]
    %v206 = vld [vmem:[#allocation7 + $0x50] sm:$0xf]
    %v207 = vld [vmem:[#allocation7 + $0x54] sm:$0xf]
    %v208 = vld [vmem:[#allocation7 + $0x58] sm:$0xf]
    %v209 = vld [vmem:[#allocation7 + $0x5c] sm:$0xf]
    %v210 = vld [vmem:[#allocation7 + $0x60] sm:$0xf]
    %v211 = vld [vmem:[#allocation7 + $0x64] sm:$0xf]
    %v212 = vld [vmem:[#allocation7 + $0x68] sm:$0xf]
    %v213 = vld [vmem:[#allocation7 + $0x6c] sm:$0xf]
    %v214 = vld [vmem:[#allocation7 + $0x70] sm:$0xf]
    %v215 = vld [vmem:[#allocation7 + $0x74] sm:$0xf]
    %v216 = vld [vmem:[#allocation7 + $0x78] sm:$0xf]
    %v217 = vld [vmem:[#allocation7 + $0x7c] sm:$0xf]
    %v218 = vld [vmem:[%s4] sm:$0x1]
    %v220 = vlaneseq
    %v221 = vshrl.u32 %v220, 7
    %v222 = vsub.s32 0, %v221
    %v223 = vrot.slane %v218, %v222
    %v257 = vunpack.c.l.b16 %v186
    %v258 = vunpack.c.l.b16 %v187
    %v259 = vunpack.c.l.b16 %v188
    %v260 = vunpack.c.l.b16 %v189
    %v261 = vunpack.c.l.b16 %v190
    %v262 = vunpack.c.l.b16 %v191
    %v263 = vunpack.c.l.b16 %v192
    %v264 = vunpack.c.l.b16 %v193
    %v265 = vunpack.c.l.b16 %v194
    %v266 = vunpack.c.l.b16 %v195
    %v267 = vunpack.c.l.b16 %v196
    %v268 = vunpack.c.l.b16 %v197
    %v269 = vunpack.c.l.b16 %v198
    %v270 = vunpack.c.l.b16 %v199
    %v271 = vunpack.c.l.b16 %v200
    %v272 = vunpack.c.l.b16 %v201
    %v273 = vunpack.c.l.b16 %v202
    %v274 = vunpack.c.l.b16 %v203
    %v275 = vunpack.c.l.b16 %v204
    %v276 = vunpack.c.l.b16 %v205
    %v277 = vunpack.c.l.b16 %v206
    %v278 = vunpack.c.l.b16 %v207
    %v279 = vunpack.c.l.b16 %v208
    %v280 = vunpack.c.l.b16 %v209
    %v281 = vunpack.c.l.b16 %v210
    %v282 = vunpack.c.l.b16 %v211
    %v283 = vunpack.c.l.b16 %v212
    %v284 = vunpack.c.l.b16 %v213
    %v285 = vunpack.c.l.b16 %v214
    %v286 = vunpack.c.l.b16 %v215
    %v287 = vunpack.c.l.b16 %v216
    %v288 = vunpack.c.l.b16 %v217
    %v289 = vpack.c.b16 %v258, %v257
    %v290 = vpack.c.b16 %v260, %v259
    %v291 = vpack.c.b16 %v262, %v261
    %v292 = vpack.c.b16 %v264, %v263
    %v293 = vpack.c.b16 %v266, %v265
    %v294 = vpack.c.b16 %v268, %v267
    %v295 = vpack.c.b16 %v270, %v269
    %v296 = vpack.c.b16 %v272, %v271
    %v297 = vpack.c.b16 %v274, %v273
    %v298 = vpack.c.b16 %v276, %v275
    %v299 = vpack.c.b16 %v278, %v277
    %v300 = vpack.c.b16 %v280, %v279
    %v301 = vpack.c.b16 %v282, %v281
    %v302 = vpack.c.b16 %v284, %v283
    %v303 = vpack.c.b16 %v286, %v285
    %v304 = vpack.c.b16 %v288, %v287
    %321 = vmatprep.subr.bf16.mxu0 0
    %322 = vmatpush1.bf16.msra.mxu0 %v296
    %323 = vmatprep.subr.bf16.mxu0 0
    %324 = vmatpush1.bf16.msra.mxu0 %v295
    %325 = vmatprep.subr.bf16.mxu0 0
    %326 = vmatpush1.bf16.msra.mxu0 %v294
    %327 = vmatprep.subr.bf16.mxu0 0
    %328 = vmatpush1.bf16.msra.mxu0 %v293
    %329 = vmatprep.subr.bf16.mxu0 0
    %330 = vmatpush1.bf16.msra.mxu0 %v292
    %331 = vmatprep.subr.bf16.mxu0 0
    %332 = vmatpush1.bf16.msra.mxu0 %v291
    %333 = vmatprep.subr.bf16.mxu0 0
    %334 = vmatpush1.bf16.msra.mxu0 %v290
    %335 = vmatprep.subr.bf16.mxu0 0
    %336 = vmatpush1.bf16.msra.mxu0 %v289
    %337 = vmatprep.subr.bf16.mxu0 0
    %338 = vmatpush2.bf16.msra.mxu0 %v304
    %339 = vmatprep.subr.bf16.mxu0 0
    %340 = vmatpush2.bf16.msra.mxu0 %v303
    %341 = vmatprep.subr.bf16.mxu0 0
    %342 = vmatpush2.bf16.msra.mxu0 %v302
    %343 = vmatprep.subr.bf16.mxu0 0
    %344 = vmatpush2.bf16.msra.mxu0 %v301
    %345 = vmatprep.subr.bf16.mxu0 0
    %346 = vmatpush2.bf16.msra.mxu0 %v300
    %347 = vmatprep.subr.bf16.mxu0 0
    %348 = vmatpush2.bf16.msra.mxu0 %v299
    %349 = vmatprep.subr.bf16.mxu0 0
    %350 = vmatpush2.bf16.msra.mxu0 %v298
    %351 = vmatprep.subr.bf16.mxu0 0
    %352 = vmatpush2.bf16.msra.mxu0 %v297
    %353 = vmatprep.mubr.bf16.mxu0 %v185
    %354 = vmatmul.mubr.bf16.gmra.mxu0 %v184
    %v355 = vpop.f32.mrf.mxu0
    %v356 = vadd.f32 %v223, %v355
    %v357 = vpop.f32.mrf.mxu0
    %v358 = vpop.f32.mrf.mxu0
    %v359 = vpop.f32.mrf.mxu0
    %360 = vdwg.mxu0
    %v361 = vmax.f32 %v356, 0.0
    %v362 = vpack.c.bf16 %v361, %v361
    %v363 = vld [vmem:[#allocation9] sm:$0xf]
    %v364 = vld [vmem:[#allocation9 + $0x4] sm:$0xf]
    %v365 = vld [vmem:[#allocation9 + $0x8] sm:$0xf]
    %v366 = vld [vmem:[#allocation9 + $0xc] sm:$0xf]
    %v367 = vld [vmem:[#allocation9 + $0x10] sm:$0xf]
    %v368 = vld [vmem:[#allocation9 + $0x14] sm:$0xf]
    %v369 = vld [vmem:[#allocation9 + $0x18] sm:$0xf]
    %v370 = vld [vmem:[#allocation9 + $0x1c] sm:$0xf]
    %v371 = vld [vmem:[#allocation9 + $0x20] sm:$0xf]
    %v372 = vld [vmem:[#allocation9 + $0x24] sm:$0xf]
    %v373 = vld [vmem:[#allocation9 + $0x28] sm:$0xf]
    %v374 = vld [vmem:[#allocation9 + $0x2c] sm:$0xf]
    %v375 = vld [vmem:[#allocation9 + $0x30] sm:$0xf]
    %v376 = vld [vmem:[#allocation9 + $0x34] sm:$0xf]
    %v377 = vld [vmem:[#allocation9 + $0x38] sm:$0xf]
    %v378 = vld [vmem:[#allocation9 + $0x3c] sm:$0xf]
    %v379 = vld [vmem:[%s6] sm:$0x1]
    %v381 = vlaneseq
    %v382 = vshrl.u32 %v381, 7
    %v383 = vsub.s32 0, %v382
    %v384 = vrot.slane %v379, %v383
    %v402 = vunpack.c.l.b16 %v363
    %v403 = vunpack.c.l.b16 %v364
    %v404 = vunpack.c.l.b16 %v365
    %v405 = vunpack.c.l.b16 %v366
    %v406 = vunpack.c.l.b16 %v367
    %v407 = vunpack.c.l.b16 %v368
    %v408 = vunpack.c.l.b16 %v369
    %v409 = vunpack.c.l.b16 %v370
    %v410 = vunpack.c.l.b16 %v371
    %v411 = vunpack.c.l.b16 %v372
    %v412 = vunpack.c.l.b16 %v373
    %v413 = vunpack.c.l.b16 %v374
    %v414 = vunpack.c.l.b16 %v375
    %v415 = vunpack.c.l.b16 %v376
    %v416 = vunpack.c.l.b16 %v377
    %v417 = vunpack.c.l.b16 %v378
    %v418 = vpack.c.b16 %v403, %v402
    %v419 = vpack.c.b16 %v405, %v404
    %v420 = vpack.c.b16 %v407, %v406
    %v421 = vpack.c.b16 %v409, %v408
    %v422 = vpack.c.b16 %v411, %v410
    %v423 = vpack.c.b16 %v413, %v412
    %v424 = vpack.c.b16 %v415, %v414
    %v425 = vpack.c.b16 %v417, %v416
    %434 = vmatprep.subr.bf16.mxu0 0
    %435 = vmatpush1.bf16.msra.mxu0 %v425
    %436 = vmatprep.subr.bf16.mxu0 0
    %437 = vmatpush1.bf16.msra.mxu0 %v424
    %438 = vmatprep.subr.bf16.mxu0 0
    %439 = vmatpush1.bf16.msra.mxu0 %v423
    %440 = vmatprep.subr.bf16.mxu0 0
    %441 = vmatpush1.bf16.msra.mxu0 %v422
    %442 = vmatprep.subr.bf16.mxu0 0
    %443 = vmatpush1.bf16.msra.mxu0 %v421
    %444 = vmatprep.subr.bf16.mxu0 0
    %445 = vmatpush1.bf16.msra.mxu0 %v420
    %446 = vmatprep.subr.bf16.mxu0 0
    %447 = vmatpush1.bf16.msra.mxu0 %v419
    %448 = vmatprep.subr.bf16.mxu0 0
    %449 = vmatpush1.bf16.msra.mxu0 %v418
    %450 = vmatprep.subr.bf16.mxu0 0
    %451 = vmatpush2.bf16.msra.mxu0 0
    %452 = vmatprep.subr.bf16.mxu0 0
    %453 = vmatpush2.bf16.msra.mxu0 0
    %454 = vmatprep.subr.bf16.mxu0 0
    %455 = vmatpush2.bf16.msra.mxu0 0
    %456 = vmatprep.subr.bf16.mxu0 0
    %457 = vmatpush2.bf16.msra.mxu0 0
    %458 = vmatprep.subr.bf16.mxu0 0
    %459 = vmatpush2.bf16.msra.mxu0 0
    %460 = vmatprep.subr.bf16.mxu0 0
    %461 = vmatpush2.bf16.msra.mxu0 0
    %462 = vmatprep.subr.bf16.mxu0 0
    %463 = vmatpush2.bf16.msra.mxu0 0
    %464 = vmatprep.subr.bf16.mxu0 0
    %465 = vmatpush2.bf16.msra.mxu0 0
    %466 = vmatprep.mubr.bf16.mxu0 0
    %467 = vmatmul.mubr.bf16.gmra.mxu0 %v362
    %v468 = vpop.f32.mrf.mxu0
    %v469 = vadd.f32 %v384, %v468
    %v470 = vpop.f32.mrf.mxu0
    %v471 = vpop.f32.mrf.mxu0
    %v472 = vpop.f32.mrf.mxu0
    %473 = vdwg.mxu0
    %v474 = vpack.c.bf16 %v469, %v469
    %475 = vst [vmem:[%s7] sm:$0xf] %v474
    // Predicated region
    $region50: #{tictactoe_net_forward.1} parent=1 // pred_check
      _
    $region51: #{tictactoe_net_forward.1} parent=1 // pred_check_branch
      %477 = sbr.rel (0) target = $region53
    $region52: #{tictactoe_net_forward.1} parent=1 // pred_region
      _
    $region53: #{tictactoe_net_forward.1} parent=1 // pred_fallthru
      _
    // Predicated region
    $region54: #{tictactoe_net_forward.1} parent=1 // pred_check
      _
    $region55: #{tictactoe_net_forward.1} parent=1 // pred_check_branch
      %479 = sbr.rel (0) target = $region57
    $region56: #{tictactoe_net_forward.1} parent=1 // pred_region
      _
    $region57: #{tictactoe_net_forward.1} parent=1 // pred_fallthru
      _
    %480 = vsyncpa [#allocation3], 1
    %481 = vsyncpa [#allocation5], 1
    %482 = vsyncpa [#allocation8], 1

</llo_original>
